<compile_context>
chip_gen: v6e
topology: v6e:2x2x1
jax: 0.10.0
libtpu: 0.0.40
codegen_flags: <defaults>
</compile_context>

<pallas_src>
import functools

import jax
import jax.numpy as jnp
import numpy as np
from jax.experimental import pallas as pl
from jax.experimental.pallas import tpu as pltpu

HIDDEN = 128  # hidden width fixed by the module


def _make_kernel(num_hidden_layers: int, has_head: bool, apply_softmax: bool):
    """Fused MLP kernel for a static layer count (refs: s, (w,b)*, out)."""

    def kernel(*refs):
        s_ref = refs[0]
        out_ref = refs[-1]

        h = s_ref[...].astype(jnp.float32)
        idx = 1
        # Hidden stack: Linear + ReLU, all fused in one body so every weight is
        # read from VMEM exactly once per batch tile.
        for _ in range(num_hidden_layers):
            w = refs[idx][...]
            b = refs[idx + 1][...]
            idx += 2
            h = jnp.dot(h, w, preferred_element_type=jnp.float32) + b
            h = jnp.maximum(h, 0.0)
        # Optional action head (no ReLU).
        if has_head:
            w = refs[idx][...]
            b = refs[idx + 1][...]
            idx += 2
            h = jnp.dot(h, w, preferred_element_type=jnp.float32) + b
        # Optional softmax over the last dim.
        if apply_softmax:
            m = jnp.max(h, axis=-1, keepdims=True)
            e = jnp.exp(h - m)
            h = e * pl.reciprocal(jnp.sum(e, axis=-1, keepdims=True), approx=False)

        out_ref[...] = h.astype(out_ref.dtype)

    return kernel


def net_forward(s, params, *, softmax: bool = False, state=None):
    """s: (B, *state_shape) float; returns (logits (B, out_dim), state)."""
    B = s.shape[0]
    x = s.reshape(B, -1).astype(jnp.float32)          # flatten, like s.view(batch, -1)
    D = x.shape[1]

    hidden_layers = params["hidden"]                   # list of (W (in,out), b (1,out))
    head = params.get("head")                          # (W (H,A), b (1,A)) or None
    out_dim = head[0].shape[1] if head is not None else hidden_layers[-1][0].shape[1]

    # Batch tiling: multiple of 8 sublanes, capped at 128 rows per tile.
    TB = 128 if B >= 128 else int(((B + 7) // 8) * 8)
    Bp = int(pl.cdiv(B, TB)) * TB
    if Bp != B:
        x = jnp.pad(x, ((0, Bp - B), (0, 0)))

    inputs = [x]
    in_specs = [pl.BlockSpec((TB, D), lambda i: (i, 0))]
    all_layers = list(hidden_layers) + ([head] if head is not None else [])
    for (w, b) in all_layers:
        inputs += [w, b]
        # Constant block index -> weights/biases stay resident in VMEM across
        # the whole batch grid (no re-DMA per tile).
        in_specs += [
            pl.BlockSpec(w.shape, lambda i: (0, 0)),
            pl.BlockSpec(b.shape, lambda i: (0, 0)),
        ]

    kernel = _make_kernel(len(hidden_layers), head is not None, softmax)

    out = pl.pallas_call(
        kernel,
        out_shape=jax.ShapeDtypeStruct((Bp, out_dim), jnp.float32),
        grid=(Bp // TB,),
        in_specs=in_specs,
        out_specs=pl.BlockSpec((TB, out_dim), lambda i: (i, 0)),
        compiler_params=pltpu.CompilerParams(
            dimension_semantics=("parallel",)),       # batch axis -> both TCs on v7x
    )(*inputs)

    logits = out[:B]
    return logits, state                               # state passed through (module semantics)


def init_params(key, layer_num, state_dim, action_dim=0, hidden=HIDDEN):
    """PyTorch-style uniform(-1/sqrt(fan_in), 1/sqrt(fan_in)) init.

    Weights are stored pre-transposed as (in_features, out_features) so the
    kernel computes h @ W + b directly (no transposes at call time).
    """
    n_linear = layer_num + 1 + (1 if action_dim else 0)
    keys = jax.random.split(key, 2 * n_linear)
    ki = 0

    hidden_layers = []
    d_in = state_dim
    for _ in range(layer_num + 1):                     # Linear(D,128) + layer_num x Linear(128,128)
        bound = 1.0 / np.sqrt(d_in)
        w = jax.random.uniform(keys[ki], (d_in, hidden), jnp.float32, -bound, bound); ki += 1
        b = jax.random.uniform(keys[ki], (1, hidden), jnp.float32, -bound, bound); ki += 1
        hidden_layers.append((w, b))
        d_in = hidden

    head = None
    if action_dim:
        bound = 1.0 / np.sqrt(hidden)
        w = jax.random.uniform(keys[ki], (hidden, action_dim), jnp.float32, -bound, bound); ki += 1
        b = jax.random.uniform(keys[ki], (1, action_dim), jnp.float32, -bound, bound); ki += 1
        head = (w, b)

    return {"hidden": hidden_layers, "head": head}


def reference_forward(s, params, softmax=False):
    """Pure-JAX reference of the same math (for correctness check)."""
    B = s.shape[0]
    h = s.reshape(B, -1).astype(jnp.float32)
    for (w, b) in params["hidden"]:
        h = jnp.maximum(h @ w + b, 0.0)
    if params.get("head") is not None:
        w, b = params["head"]
        h = h @ w + b
    if softmax:
        h = jax.nn.softmax(h, axis=-1)
    return h


if __name__ == "__main__":
    # Small shapes consistent with the module:
    #   Net(layer_num=2, state_shape=(4, 4), action_shape=5), batch=4
    layer_num = 2
    state_shape = (4, 4)
    state_dim = int(np.prod(state_shape))
    action_dim = 5
    B = 4

    key = jax.random.PRNGKey(0)
    k_p, k_s = jax.random.split(key)
    params = init_params(k_p, layer_num, state_dim, action_dim)
    s = jax.random.normal(k_s, (B,) + state_shape, jnp.float32)

    # Plain logits path.
    logits, state_out = net_forward(s, params, softmax=False, state=None)
    logits = jax.block_until_ready(logits)
    ref = jax.block_until_ready(reference_forward(s, params, softmax=False))
    assert logits.shape == (B, action_dim), logits.shape
    assert state_out is None
    np.testing.assert_allclose(np.asarray(logits), np.asarray(ref), rtol=1e-3, atol=1e-3)

    # Softmax head path (module's optional Softmax(dim=-1)).
    probs, _ = net_forward(s, params, softmax=True, state=None)
    probs = jax.block_until_ready(probs)
    ref_p = jax.block_until_ready(reference_forward(s, params, softmax=True))
    np.testing.assert_allclose(np.asarray(probs), np.asarray(ref_p), rtol=1e-3, atol=1e-3)

    print("KERNEL_OK")
</pallas_src>

<mosaic_0001>
module attributes {stable_mosaic.version = 11 : i64} {
  func.func @kernel(%arg0: i32, %arg1: memref<8x16xf32, #tpu.memory_space<vmem>>, %arg2: memref<16x128xf32, #tpu.memory_space<vmem>>, %arg3: memref<1x128xf32, #tpu.memory_space<vmem>>, %arg4: memref<128x128xf32, #tpu.memory_space<vmem>>, %arg5: memref<1x128xf32, #tpu.memory_space<vmem>>, %arg6: memref<128x128xf32, #tpu.memory_space<vmem>>, %arg7: memref<1x128xf32, #tpu.memory_space<vmem>>, %arg8: memref<128x5xf32, #tpu.memory_space<vmem>>, %arg9: memref<1x5xf32, #tpu.memory_space<vmem>>, %arg10: memref<8x5xf32, #tpu.memory_space<vmem>>) attributes {dimension_semantics = [#tpu.dimension_semantics<parallel>], iteration_bounds = array<i64: 1>, scalar_prefetch = 0 : i64, scratch_operands = 0 : i64, tpu.core_type = #tpu.core_type<tc>, window_params = [{transform_indices = @transform_0, window_bounds = array<i64: 8, 16>}, {pipeline_mode = #tpu.pipeline_mode<synchronous>, transform_indices = @transform_1, window_bounds = array<i64: 16, 128>}, {pipeline_mode = #tpu.pipeline_mode<synchronous>, transform_indices = @transform_2, window_bounds = array<i64: 1, 128>}, {pipeline_mode = #tpu.pipeline_mode<synchronous>, transform_indices = @transform_3, window_bounds = array<i64: 128, 128>}, {pipeline_mode = #tpu.pipeline_mode<synchronous>, transform_indices = @transform_4, window_bounds = array<i64: 1, 128>}, {pipeline_mode = #tpu.pipeline_mode<synchronous>, transform_indices = @transform_5, window_bounds = array<i64: 128, 128>}, {pipeline_mode = #tpu.pipeline_mode<synchronous>, transform_indices = @transform_6, window_bounds = array<i64: 1, 128>}, {pipeline_mode = #tpu.pipeline_mode<synchronous>, transform_indices = @transform_7, window_bounds = array<i64: 128, 5>}, {pipeline_mode = #tpu.pipeline_mode<synchronous>, transform_indices = @transform_8, window_bounds = array<i64: 1, 5>}, {transform_indices = @transform_9, window_bounds = array<i64: 8, 5>}]} {
    %c0 = arith.constant 0 : index
    %c0_0 = arith.constant 0 : index
    %0 = vector.load %arg1[%c0, %c0_0] : memref<8x16xf32, #tpu.memory_space<vmem>>, vector<8x16xf32>
    %c0_1 = arith.constant 0 : index
    %c0_2 = arith.constant 0 : index
    %1 = vector.load %arg2[%c0_1, %c0_2] : memref<16x128xf32, #tpu.memory_space<vmem>>, vector<16x128xf32>
    %c0_3 = arith.constant 0 : index
    %c0_4 = arith.constant 0 : index
    %2 = vector.load %arg3[%c0_3, %c0_4] : memref<1x128xf32, #tpu.memory_space<vmem>>, vector<1x128xf32>
    %cst = arith.constant dense<0.000000e+00> : vector<8x128xf32>
    %3 = tpu.matmul %0, %1, %cst {dimension_numbers = #tpu.dot_dimension_numbers<[1], [0], [0], [1], [0, 0, 1, 1], [], []>} : vector<8x16xf32>, vector<16x128xf32>, vector<8x128xf32> -> vector<8x128xf32>
    %4 = vector.broadcast %2 : vector<1x128xf32> to vector<8x128xf32>
    %5 = arith.addf %3, %4 : vector<8x128xf32>
    %cst_5 = arith.constant 0.000000e+00 : f32
    %6 = vector.broadcast %cst_5 : f32 to vector<8x128xf32>
    %7 = arith.maximumf %5, %6 : vector<8x128xf32>
    %c0_6 = arith.constant 0 : index
    %c0_7 = arith.constant 0 : index
    %8 = vector.load %arg4[%c0_6, %c0_7] : memref<128x128xf32, #tpu.memory_space<vmem>>, vector<128x128xf32>
    %c0_8 = arith.constant 0 : index
    %c0_9 = arith.constant 0 : index
    %9 = vector.load %arg5[%c0_8, %c0_9] : memref<1x128xf32, #tpu.memory_space<vmem>>, vector<1x128xf32>
    %cst_10 = arith.constant dense<0.000000e+00> : vector<8x128xf32>
    %10 = tpu.matmul %7, %8, %cst_10 {dimension_numbers = #tpu.dot_dimension_numbers<[1], [0], [0], [1], [0, 0, 1, 1], [], []>} : vector<8x128xf32>, vector<128x128xf32>, vector<8x128xf32> -> vector<8x128xf32>
    %11 = vector.broadcast %9 : vector<1x128xf32> to vector<8x128xf32>
    %12 = arith.addf %10, %11 : vector<8x128xf32>
    %cst_11 = arith.constant 0.000000e+00 : f32
    %13 = vector.broadcast %cst_11 : f32 to vector<8x128xf32>
    %14 = arith.maximumf %12, %13 : vector<8x128xf32>
    %c0_12 = arith.constant 0 : index
    %c0_13 = arith.constant 0 : index
    %15 = vector.load %arg6[%c0_12, %c0_13] : memref<128x128xf32, #tpu.memory_space<vmem>>, vector<128x128xf32>
    %c0_14 = arith.constant 0 : index
    %c0_15 = arith.constant 0 : index
    %16 = vector.load %arg7[%c0_14, %c0_15] : memref<1x128xf32, #tpu.memory_space<vmem>>, vector<1x128xf32>
    %cst_16 = arith.constant dense<0.000000e+00> : vector<8x128xf32>
    %17 = tpu.matmul %14, %15, %cst_16 {dimension_numbers = #tpu.dot_dimension_numbers<[1], [0], [0], [1], [0, 0, 1, 1], [], []>} : vector<8x128xf32>, vector<128x128xf32>, vector<8x128xf32> -> vector<8x128xf32>
    %18 = vector.broadcast %16 : vector<1x128xf32> to vector<8x128xf32>
    %19 = arith.addf %17, %18 : vector<8x128xf32>
    %cst_17 = arith.constant 0.000000e+00 : f32
    %20 = vector.broadcast %cst_17 : f32 to vector<8x128xf32>
    %21 = arith.maximumf %19, %20 : vector<8x128xf32>
    %c0_18 = arith.constant 0 : index
    %c0_19 = arith.constant 0 : index
    %22 = vector.load %arg8[%c0_18, %c0_19] : memref<128x5xf32, #tpu.memory_space<vmem>>, vector<128x5xf32>
    %c0_20 = arith.constant 0 : index
    %c0_21 = arith.constant 0 : index
    %23 = vector.load %arg9[%c0_20, %c0_21] : memref<1x5xf32, #tpu.memory_space<vmem>>, vector<1x5xf32>
    %cst_22 = arith.constant dense<0.000000e+00> : vector<8x5xf32>
    %24 = tpu.matmul %21, %22, %cst_22 {dimension_numbers = #tpu.dot_dimension_numbers<[1], [0], [0], [1], [0, 0, 1, 1], [], []>} : vector<8x128xf32>, vector<128x5xf32>, vector<8x5xf32> -> vector<8x5xf32>
    %25 = vector.broadcast %23 : vector<1x5xf32> to vector<8x5xf32>
    %26 = arith.addf %24, %25 : vector<8x5xf32>
    %c0_23 = arith.constant 0 : index
    %c0_24 = arith.constant 0 : index
    %27 = vector.load %arg10[%c0_23, %c0_24] : memref<8x5xf32, #tpu.memory_space<vmem>>, vector<8x5xf32>
    tpu.vector_store %arg10[%c0_23, %c0_24], %26 {strides = array<i32>} : memref<8x5xf32, #tpu.memory_space<vmem>>, vector<8x5xf32>,
    return
  }
  func.func @transform_0(%arg0: i32) -> (i32, i32) {
    %c0_i32 = arith.constant 0 : i32
    %c0_i32_0 = arith.constant 0 : i32
    return %arg0, %c0_i32 : i32, i32
  }
  func.func @transform_1(%arg0: i32) -> (i32, i32) {
    %c0_i32 = arith.constant 0 : i32
    %c0_i32_0 = arith.constant 0 : i32
    %c0_i32_1 = arith.constant 0 : i32
    return %c0_i32, %c0_i32_0 : i32, i32
  }
  func.func @transform_2(%arg0: i32) -> (i32, i32) {
    %c0_i32 = arith.constant 0 : i32
    %c0_i32_0 = arith.constant 0 : i32
    %c0_i32_1 = arith.constant 0 : i32
    return %c0_i32, %c0_i32_0 : i32, i32
  }
  func.func @transform_3(%arg0: i32) -> (i32, i32) {
    %c0_i32 = arith.constant 0 : i32
    %c0_i32_0 = arith.constant 0 : i32
    %c0_i32_1 = arith.constant 0 : i32
    return %c0_i32, %c0_i32_0 : i32, i32
  }
  func.func @transform_4(%arg0: i32) -> (i32, i32) {
    %c0_i32 = arith.constant 0 : i32
    %c0_i32_0 = arith.constant 0 : i32
    %c0_i32_1 = arith.constant 0 : i32
    return %c0_i32, %c0_i32_0 : i32, i32
  }
  func.func @transform_5(%arg0: i32) -> (i32, i32) {
    %c0_i32 = arith.constant 0 : i32
    %c0_i32_0 = arith.constant 0 : i32
    %c0_i32_1 = arith.constant 0 : i32
    return %c0_i32, %c0_i32_0 : i32, i32
  }
  func.func @transform_6(%arg0: i32) -> (i32, i32) {
    %c0_i32 = arith.constant 0 : i32
    %c0_i32_0 = arith.constant 0 : i32
    %c0_i32_1 = arith.constant 0 : i32
    return %c0_i32, %c0_i32_0 : i32, i32
  }
  func.func @transform_7(%arg0: i32) -> (i32, i32) {
    %c0_i32 = arith.constant 0 : i32
    %c0_i32_0 = arith.constant 0 : i32
    %c0_i32_1 = arith.constant 0 : i32
    return %c0_i32, %c0_i32_0 : i32, i32
  }
  func.func @transform_8(%arg0: i32) -> (i32, i32) {
    %c0_i32 = arith.constant 0 : i32
    %c0_i32_0 = arith.constant 0 : i32
    %c0_i32_1 = arith.constant 0 : i32
    return %c0_i32, %c0_i32_0 : i32, i32
  }
  func.func @transform_9(%arg0: i32) -> (i32, i32) {
    %c0_i32 = arith.constant 0 : i32
    %c0_i32_0 = arith.constant 0 : i32
    return %arg0, %c0_i32 : i32, i32
  }
}

</mosaic_0001>

<llo_original>
// kernel: tpu_custom_call.1
$region0: #{tpu_custom_call.1}
  #allocation0 [shape = 'u32[]', space=smem, size = 0x4, offset = 0x4, fixed_abs, tag = 'smem constant byte address 0x4 - core index']
  #allocation1 [shape = 'u32[144,128]{1,0:T(1,128)}', space=vmem, size = 0x12000, scoped, tag = 'internal scratch']
  %s0 = inlined_call_operand.vmem [shape: f32[8,16], index: 0, kind: input, shape index: {}]
  %s1 = inlined_call_operand.hbm [shape: f32[16,128], index: 1, kind: input, shape index: {}]
  %s2 = inlined_call_operand.vmem [shape: f32[1,128], index: 2, kind: input, shape index: {}]
  %s3 = inlined_call_operand.vmem [shape: f32[128,128], index: 3, kind: input, shape index: {}]
  %s4 = inlined_call_operand.vmem [shape: f32[1,128], index: 4, kind: input, shape index: {}]
  %s5 = inlined_call_operand.hbm [shape: f32[128,128], index: 5, kind: input, shape index: {}]
  %s6 = inlined_call_operand.vmem [shape: f32[1,128], index: 6, kind: input, shape index: {}]
  %s7 = inlined_call_operand.vmem [shape: f32[128,5], index: 7, kind: input, shape index: {}]
  %s8 = inlined_call_operand.vmem [shape: f32[1,5], index: 8, kind: input, shape index: {}]
  %s9 = inlined_call_operand.hbm [shape: f32[8,5], index: 9, kind: output, shape index: {}]
  %s10 = sld [smem:[#allocation0]]
  $region54: #{tpu_custom_call.1} parent=0
    _
  %s12 = ssub.s32 1, %s10
  %s13 = scalar_select 0, %s12, %s10
  $region1: #{tpu_custom_call.1} parent=0
    #allocation2 [shape = 'u8[8192]{0}', space=vmem, size = 0x2000, scoped, tag = 'input window, operand 1, single buffered']
    #allocation3 [shape = 's32[1]{0}', space=sflag, size = 0x4, scoped, tag = 'scoped memory for tpu_custom_call.1']
    #allocation4 [shape = 's32[1]{0}', space=sflag, size = 0x4, scoped, tag = 'scoped memory for tpu_custom_call.1']
    #allocation5 [shape = 'u8[65536]{0}', space=vmem, size = 0x10000, scoped, tag = 'input window, operand 5, single buffered']
    #allocation6 [shape = 's32[1]{0}', space=sflag, size = 0x4, scoped, tag = 'scoped memory for tpu_custom_call.1']
    #allocation7 [shape = 'u8[4096]{0}', space=vmem, size = 0x1000, scoped, tag = 'output window, operand 0, single buffered']
    %14 = vsyncpa [#allocation3], 0
    %15 = vsyncpa [#allocation6], 0
    %16 = vsyncpa [#allocation4], 0
    // Predicated region
    $region2: #{tpu_custom_call.1} parent=1 // pred_check
      _
    $region3: #{tpu_custom_call.1} parent=1 // pred_check_branch
      %18 = sbr.rel (0) target = $region5
    $region4: #{tpu_custom_call.1} parent=1 // pred_region
      _
    $region5: #{tpu_custom_call.1} parent=1 // pred_fallthru
      _
    // Predicated region
    $region6: #{tpu_custom_call.1} parent=1 // pred_check
      _
    $region7: #{tpu_custom_call.1} parent=1 // pred_check_branch
      %20 = sbr.rel (0) target = $region9
    $region8: #{tpu_custom_call.1} parent=1 // pred_region
      %s22 = ssub.s32 256, 256
      %23 = vsyncadd [#allocation3], %s22
      %s24 = sshll.u32 [#allocation2], 4
      %s25 = int_to_ptr.vmem [resolvable:$true] %s24
      %30 = dma.hbm_to_vmem [thread:$0]  %s1, 256, %s25, [#allocation3], 128, 128, 8
    $region9: #{tpu_custom_call.1} parent=1 // pred_fallthru
      _
    // Predicated region
    $region10: #{tpu_custom_call.1} parent=1 // pred_check
      _
    $region11: #{tpu_custom_call.1} parent=1 // pred_check_branch
      %32 = sbr.rel (0) target = $region13
    $region12: #{tpu_custom_call.1} parent=1 // pred_region
      _
    $region13: #{tpu_custom_call.1} parent=1 // pred_fallthru
      _
    // Predicated region
    $region14: #{tpu_custom_call.1} parent=1 // pred_check
      _
    $region15: #{tpu_custom_call.1} parent=1 // pred_check_branch
      %34 = sbr.rel (0) target = $region17
    $region16: #{tpu_custom_call.1} parent=1 // pred_region
      _
    $region17: #{tpu_custom_call.1} parent=1 // pred_fallthru
      _
    // Predicated region
    $region18: #{tpu_custom_call.1} parent=1 // pred_check
      _
    $region19: #{tpu_custom_call.1} parent=1 // pred_check_branch
      %36 = sbr.rel (0) target = $region21
    $region20: #{tpu_custom_call.1} parent=1 // pred_region
      _
    $region21: #{tpu_custom_call.1} parent=1 // pred_fallthru
      _
    // Predicated region
    $region22: #{tpu_custom_call.1} parent=1 // pred_check
      _
    $region23: #{tpu_custom_call.1} parent=1 // pred_check_branch
      %38 = sbr.rel (0) target = $region25
    $region24: #{tpu_custom_call.1} parent=1 // pred_region
      %s40 = ssub.s32 2048, 2048
      %41 = vsyncadd [#allocation6], %s40
      %s42 = sshll.u32 [#allocation5], 4
      %s43 = int_to_ptr.vmem [resolvable:$true] %s42
      %48 = dma.hbm_to_vmem [thread:$0]  %s5, 2048, %s43, [#allocation6], 128, 128, 8
    $region25: #{tpu_custom_call.1} parent=1 // pred_fallthru
      _
    // Predicated region
    $region26: #{tpu_custom_call.1} parent=1 // pred_check
      _
    $region27: #{tpu_custom_call.1} parent=1 // pred_check_branch
      %50 = sbr.rel (0) target = $region29
    $region28: #{tpu_custom_call.1} parent=1 // pred_region
      _
    $region29: #{tpu_custom_call.1} parent=1 // pred_fallthru
      _
    // Predicated region
    $region30: #{tpu_custom_call.1} parent=1 // pred_check
      _
    $region31: #{tpu_custom_call.1} parent=1 // pred_check_branch
      %52 = sbr.rel (0) target = $region33
    $region32: #{tpu_custom_call.1} parent=1 // pred_region
      _
    $region33: #{tpu_custom_call.1} parent=1 // pred_fallthru
      _
    // Predicated region
    $region34: #{tpu_custom_call.1} parent=1 // pred_check
      _
    $region35: #{tpu_custom_call.1} parent=1 // pred_check_branch
      %54 = sbr.rel (0) target = $region37
    $region36: #{tpu_custom_call.1} parent=1 // pred_region
      _
    $region37: #{tpu_custom_call.1} parent=1 // pred_fallthru
      _
    // Predicated region
    $region38: #{tpu_custom_call.1} parent=1 // pred_check
      _
    $region39: #{tpu_custom_call.1} parent=1 // pred_check_branch
      %56 = sbr.rel (0) target = $region41
    $region40: #{tpu_custom_call.1} parent=1 // pred_region
      %57 = dma.done [#allocation3], 256
    $region41: #{tpu_custom_call.1} parent=1 // pred_fallthru
      _
    // Predicated region
    $region42: #{tpu_custom_call.1} parent=1 // pred_check
      _
    $region43: #{tpu_custom_call.1} parent=1 // pred_check_branch
      %59 = sbr.rel (0) target = $region45
    $region44: #{tpu_custom_call.1} parent=1 // pred_region
      %60 = dma.done [#allocation6], 2048
    $region45: #{tpu_custom_call.1} parent=1 // pred_fallthru
      _
    %v61 = vld [vmem:[%s0] sm:$0xff]
    %v62 = vld [vmem:[#allocation2] sm:$0xff]
    %v63 = vld [vmem:[#allocation2 + $0x8] sm:$0xff]
    %v64 = vld [vmem:[%s2] sm:$0x1]
    %v66 = vlaneseq
    %v67 = vshrl.u32 %v66, 7
    %v68 = vsub.s32 0, %v67
    %v69 = vrot.slane %v64, %v68
    %vm71 = vcmask 130048
    %v73 = vsel %vm71, %v61, 0
    %75 = vmatprep.subr.mxu0 0.0
    %76 = vmatpush1.msra.mxu0 0.0
    %77 = vmatprep.subr.mxu0 0.0
    %78 = vmatpush1.msra.mxu0 0.0
    %79 = vmatprep.subr.mxu0 0.0
    %80 = vmatpush1.msra.mxu0 0.0
    %81 = vmatprep.subr.mxu0 0.0
    %82 = vmatpush1.msra.mxu0 0.0
    %83 = vmatprep.subr.mxu0 0.0
    %84 = vmatpush1.msra.mxu0 0.0
    %85 = vmatprep.subr.mxu0 0.0
    %86 = vmatpush1.msra.mxu0 0.0
    %87 = vmatprep.subr.mxu0 0.0
    %88 = vmatpush1.msra.mxu0 0.0
    %89 = vmatprep.subr.mxu0 0.0
    %90 = vmatpush1.msra.mxu0 0.0
    %91 = vmatprep.subr.mxu0 0.0
    %92 = vmatpush1.msra.mxu0 0.0
    %93 = vmatprep.subr.mxu0 0.0
    %94 = vmatpush1.msra.mxu0 0.0
    %95 = vmatprep.subr.mxu0 0.0
    %96 = vmatpush1.msra.mxu0 0.0
    %97 = vmatprep.subr.mxu0 0.0
    %98 = vmatpush1.msra.mxu0 0.0
    %99 = vmatprep.subr.mxu0 0.0
    %100 = vmatpush1.msra.mxu0 0.0
    %101 = vmatprep.subr.mxu0 0.0
    %102 = vmatpush1.msra.mxu0 0.0
    %103 = vmatprep.subr.mxu0 0.0
    %104 = vmatpush1.msra.mxu0 %v63
    %105 = vmatprep.subr.mxu0 0.0
    %106 = vmatpush1.msra.mxu0 %v62
    %107 = vmatprep.subr.mxu0 0.0
    %108 = vmatpush2.msra.mxu0 0.0
    %109 = vmatprep.subr.mxu0 0.0
    %110 = vmatpush2.msra.mxu0 0.0
    %111 = vmatprep.subr.mxu0 0.0
    %112 = vmatpush2.msra.mxu0 0.0
    %113 = vmatprep.subr.mxu0 0.0
    %114 = vmatpush2.msra.mxu0 0.0
    %115 = vmatprep.subr.mxu0 0.0
    %116 = vmatpush2.msra.mxu0 0.0
    %117 = vmatprep.subr.mxu0 0.0
    %118 = vmatpush2.msra.mxu0 0.0
    %119 = vmatprep.subr.mxu0 0.0
    %120 = vmatpush2.msra.mxu0 0.0
    %121 = vmatprep.subr.mxu0 0.0
    %122 = vmatpush2.msra.mxu0 0.0
    %123 = vmatprep.subr.mxu0 0.0
    %124 = vmatpush2.msra.mxu0 0.0
    %125 = vmatprep.subr.mxu0 0.0
    %126 = vmatpush2.msra.mxu0 0.0
    %127 = vmatprep.subr.mxu0 0.0
    %128 = vmatpush2.msra.mxu0 0.0
    %129 = vmatprep.subr.mxu0 0.0
    %130 = vmatpush2.msra.mxu0 0.0
    %131 = vmatprep.subr.mxu0 0.0
    %132 = vmatpush2.msra.mxu0 0.0
    %133 = vmatprep.subr.mxu0 0.0
    %134 = vmatpush2.msra.mxu0 0.0
    %135 = vmatprep.subr.mxu0 0.0
    %136 = vmatpush2.msra.mxu0 0.0
    %137 = vmatprep.subr.mxu0 0.0
    %138 = vmatpush2.msra.mxu0 0.0
    %139 = vmatprep.mubr.f32.mxu0 0.0
    %140 = vmatmul.mubr.f32.gmra.mxu0 %v73
    %v141 = vpop.f32.mrf.mxu0
    %v142 = vadd.f32 %v69, %v141
    %v143 = vpop.f32.mrf.mxu0
    %144 = vdwg.mxu0
    %v145 = vmax.f32 %v142, 0.0
    %v146 = vld [vmem:[%s3] sm:$0xff]
    %v147 = vld [vmem:[%s3 + $0x8] sm:$0xff]
    %v148 = vld [vmem:[%s3 + $0x10] sm:$0xff]
    %v149 = vld [vmem:[%s3 + $0x18] sm:$0xff]
    %v150 = vld [vmem:[%s3 + $0x20] sm:$0xff]
    %v151 = vld [vmem:[%s3 + $0x28] sm:$0xff]
    %v152 = vld [vmem:[%s3 + $0x30] sm:$0xff]
    %v153 = vld [vmem:[%s3 + $0x38] sm:$0xff]
    %v154 = vld [vmem:[%s3 + $0x40] sm:$0xff]
    %v155 = vld [vmem:[%s3 + $0x48] sm:$0xff]
    %v156 = vld [vmem:[%s3 + $0x50] sm:$0xff]
    %v157 = vld [vmem:[%s3 + $0x58] sm:$0xff]
    %v158 = vld [vmem:[%s3 + $0x60] sm:$0xff]
    %v159 = vld [vmem:[%s3 + $0x68] sm:$0xff]
    %v160 = vld [vmem:[%s3 + $0x70] sm:$0xff]
    %v161 = vld [vmem:[%s3 + $0x78] sm:$0xff]
    %v162 = vld [vmem:[%s4] sm:$0x1]
    %v164 = vlaneseq
    %v165 = vshrl.u32 %v164, 7
    %v166 = vsub.s32 0, %v165
    %v167 = vrot.slane %v162, %v166
    %169 = vmatprep.subr.mxu0 0.0
    %170 = vmatpush1.msra.mxu0 %v161
    %171 = vmatprep.subr.mxu0 0.0
    %172 = vmatpush1.msra.mxu0 %v160
    %173 = vmatprep.subr.mxu0 0.0
    %174 = vmatpush1.msra.mxu0 %v159
    %175 = vmatprep.subr.mxu0 0.0
    %176 = vmatpush1.msra.mxu0 %v158
    %177 = vmatprep.subr.mxu0 0.0
    %178 = vmatpush1.msra.mxu0 %v157
    %179 = vmatprep.subr.mxu0 0.0
    %180 = vmatpush1.msra.mxu0 %v156
    %181 = vmatprep.subr.mxu0 0.0
    %182 = vmatpush1.msra.mxu0 %v155
    %183 = vmatprep.subr.mxu0 0.0
    %184 = vmatpush1.msra.mxu0 %v154
    %185 = vmatprep.subr.mxu0 0.0
    %186 = vmatpush1.msra.mxu0 %v153
    %187 = vmatprep.subr.mxu0 0.0
    %188 = vmatpush1.msra.mxu0 %v152
    %189 = vmatprep.subr.mxu0 0.0
    %190 = vmatpush1.msra.mxu0 %v151
    %191 = vmatprep.subr.mxu0 0.0
    %192 = vmatpush1.msra.mxu0 %v150
    %193 = vmatprep.subr.mxu0 0.0
    %194 = vmatpush1.msra.mxu0 %v149
    %195 = vmatprep.subr.mxu0 0.0
    %196 = vmatpush1.msra.mxu0 %v148
    %197 = vmatprep.subr.mxu0 0.0
    %198 = vmatpush1.msra.mxu0 %v147
    %199 = vmatprep.subr.mxu0 0.0
    %200 = vmatpush1.msra.mxu0 %v146
    %201 = vmatprep.subr.mxu0 0.0
    %202 = vmatpush2.msra.mxu0 0.0
    %203 = vmatprep.subr.mxu0 0.0
    %204 = vmatpush2.msra.mxu0 0.0
    %205 = vmatprep.subr.mxu0 0.0
    %206 = vmatpush2.msra.mxu0 0.0
    %207 = vmatprep.subr.mxu0 0.0
    %208 = vmatpush2.msra.mxu0 0.0
    %209 = vmatprep.subr.mxu0 0.0
    %210 = vmatpush2.msra.mxu0 0.0
    %211 = vmatprep.subr.mxu0 0.0
    %212 = vmatpush2.msra.mxu0 0.0
    %213 = vmatprep.subr.mxu0 0.0
    %214 = vmatpush2.msra.mxu0 0.0
    %215 = vmatprep.subr.mxu0 0.0
    %216 = vmatpush2.msra.mxu0 0.0
    %217 = vmatprep.subr.mxu0 0.0
    %218 = vmatpush2.msra.mxu0 0.0
    %219 = vmatprep.subr.mxu0 0.0
    %220 = vmatpush2.msra.mxu0 0.0
    %221 = vmatprep.subr.mxu0 0.0
    %222 = vmatpush2.msra.mxu0 0.0
    %223 = vmatprep.subr.mxu0 0.0
    %224 = vmatpush2.msra.mxu0 0.0
    %225 = vmatprep.subr.mxu0 0.0
    %226 = vmatpush2.msra.mxu0 0.0
    %227 = vmatprep.subr.mxu0 0.0
    %228 = vmatpush2.msra.mxu0 0.0
    %229 = vmatprep.subr.mxu0 0.0
    %230 = vmatpush2.msra.mxu0 0.0
    %231 = vmatprep.subr.mxu0 0.0
    %232 = vmatpush2.msra.mxu0 0.0
    %233 = vmatprep.mubr.f32.mxu0 0.0
    %234 = vmatmul.mubr.f32.gmra.mxu0 %v145
    %v235 = vpop.f32.mrf.mxu0
    %v236 = vadd.f32 %v167, %v235
    %v237 = vpop.f32.mrf.mxu0
    %238 = vdwg.mxu0
    %v239 = vmax.f32 %v236, 0.0
    %v240 = vld [vmem:[#allocation5] sm:$0xff]
    %v241 = vld [vmem:[#allocation5 + $0x8] sm:$0xff]
    %v242 = vld [vmem:[#allocation5 + $0x10] sm:$0xff]
    %v243 = vld [vmem:[#allocation5 + $0x18] sm:$0xff]
    %v244 = vld [vmem:[#allocation5 + $0x20] sm:$0xff]
    %v245 = vld [vmem:[#allocation5 + $0x28] sm:$0xff]
    %v246 = vld [vmem:[#allocation5 + $0x30] sm:$0xff]
    %v247 = vld [vmem:[#allocation5 + $0x38] sm:$0xff]
    %v248 = vld [vmem:[#allocation5 + $0x40] sm:$0xff]
    %v249 = vld [vmem:[#allocation5 + $0x48] sm:$0xff]
    %v250 = vld [vmem:[#allocation5 + $0x50] sm:$0xff]
    %v251 = vld [vmem:[#allocation5 + $0x58] sm:$0xff]
    %v252 = vld [vmem:[#allocation5 + $0x60] sm:$0xff]
    %v253 = vld [vmem:[#allocation5 + $0x68] sm:$0xff]
    %v254 = vld [vmem:[#allocation5 + $0x70] sm:$0xff]
    %v255 = vld [vmem:[#allocation5 + $0x78] sm:$0xff]
    %v256 = vld [vmem:[%s6] sm:$0x1]
    %v258 = vlaneseq
    %v259 = vshrl.u32 %v258, 7
    %v260 = vsub.s32 0, %v259
    %v261 = vrot.slane %v256, %v260
    %263 = vmatprep.subr.mxu0 0.0
    %264 = vmatpush1.msra.mxu0 %v255
    %265 = vmatprep.subr.mxu0 0.0
    %266 = vmatpush1.msra.mxu0 %v254
    %267 = vmatprep.subr.mxu0 0.0
    %268 = vmatpush1.msra.mxu0 %v253
    %269 = vmatprep.subr.mxu0 0.0
    %270 = vmatpush1.msra.mxu0 %v252
    %271 = vmatprep.subr.mxu0 0.0
    %272 = vmatpush1.msra.mxu0 %v251
    %273 = vmatprep.subr.mxu0 0.0
    %274 = vmatpush1.msra.mxu0 %v250
    %275 = vmatprep.subr.mxu0 0.0
    %276 = vmatpush1.msra.mxu0 %v249
    %277 = vmatprep.subr.mxu0 0.0
    %278 = vmatpush1.msra.mxu0 %v248
    %279 = vmatprep.subr.mxu0 0.0
    %280 = vmatpush1.msra.mxu0 %v247
    %281 = vmatprep.subr.mxu0 0.0
    %282 = vmatpush1.msra.mxu0 %v246
    %283 = vmatprep.subr.mxu0 0.0
    %284 = vmatpush1.msra.mxu0 %v245
    %285 = vmatprep.subr.mxu0 0.0
    %286 = vmatpush1.msra.mxu0 %v244
    %287 = vmatprep.subr.mxu0 0.0
    %288 = vmatpush1.msra.mxu0 %v243
    %289 = vmatprep.subr.mxu0 0.0
    %290 = vmatpush1.msra.mxu0 %v242
    %291 = vmatprep.subr.mxu0 0.0
    %292 = vmatpush1.msra.mxu0 %v241
    %293 = vmatprep.subr.mxu0 0.0
    %294 = vmatpush1.msra.mxu0 %v240
    %295 = vmatprep.subr.mxu0 0.0
    %296 = vmatpush2.msra.mxu0 0.0
    %297 = vmatprep.subr.mxu0 0.0
    %298 = vmatpush2.msra.mxu0 0.0
    %299 = vmatprep.subr.mxu0 0.0
    %300 = vmatpush2.msra.mxu0 0.0
    %301 = vmatprep.subr.mxu0 0.0
    %302 = vmatpush2.msra.mxu0 0.0
    %303 = vmatprep.subr.mxu0 0.0
    %304 = vmatpush2.msra.mxu0 0.0
    %305 = vmatprep.subr.mxu0 0.0
    %306 = vmatpush2.msra.mxu0 0.0
    %307 = vmatprep.subr.mxu0 0.0
    %308 = vmatpush2.msra.mxu0 0.0
    %309 = vmatprep.subr.mxu0 0.0
    %310 = vmatpush2.msra.mxu0 0.0
    %311 = vmatprep.subr.mxu0 0.0
    %312 = vmatpush2.msra.mxu0 0.0
    %313 = vmatprep.subr.mxu0 0.0
    %314 = vmatpush2.msra.mxu0 0.0
    %315 = vmatprep.subr.mxu0 0.0
    %316 = vmatpush2.msra.mxu0 0.0
    %317 = vmatprep.subr.mxu0 0.0
    %318 = vmatpush2.msra.mxu0 0.0
    %319 = vmatprep.subr.mxu0 0.0
    %320 = vmatpush2.msra.mxu0 0.0
    %321 = vmatprep.subr.mxu0 0.0
    %322 = vmatpush2.msra.mxu0 0.0
    %323 = vmatprep.subr.mxu0 0.0
    %324 = vmatpush2.msra.mxu0 0.0
    %325 = vmatprep.subr.mxu0 0.0
    %326 = vmatpush2.msra.mxu0 0.0
    %327 = vmatprep.mubr.f32.mxu0 0.0
    %328 = vmatmul.mubr.f32.gmra.mxu0 %v239
    %v329 = vpop.f32.mrf.mxu0
    %v330 = vadd.f32 %v261, %v329
    %v331 = vpop.f32.mrf.mxu0
    %332 = vdwg.mxu0
    %v333 = vmax.f32 %v330, 0.0
    %v334 = vld [vmem:[%s7] sm:$0xff]
    %v335 = vld [vmem:[%s7 + $0x8] sm:$0xff]
    %v336 = vld [vmem:[%s7 + $0x10] sm:$0xff]
    %v337 = vld [vmem:[%s7 + $0x18] sm:$0xff]
    %v338 = vld [vmem:[%s7 + $0x20] sm:$0xff]
    %v339 = vld [vmem:[%s7 + $0x28] sm:$0xff]
    %v340 = vld [vmem:[%s7 + $0x30] sm:$0xff]
    %v341 = vld [vmem:[%s7 + $0x38] sm:$0xff]
    %v342 = vld [vmem:[%s7 + $0x40] sm:$0xff]
    %v343 = vld [vmem:[%s7 + $0x48] sm:$0xff]
    %v344 = vld [vmem:[%s7 + $0x50] sm:$0xff]
    %v345 = vld [vmem:[%s7 + $0x58] sm:$0xff]
    %v346 = vld [vmem:[%s7 + $0x60] sm:$0xff]
    %v347 = vld [vmem:[%s7 + $0x68] sm:$0xff]
    %v348 = vld [vmem:[%s7 + $0x70] sm:$0xff]
    %v349 = vld [vmem:[%s7 + $0x78] sm:$0xff]
    %v350 = vld [vmem:[%s8] sm:$0x1]
    %v352 = vlaneseq
    %v353 = vshrl.u32 %v352, 7
    %v354 = vsub.s32 0, %v353
    %v355 = vrot.slane %v350, %v354
    %357 = vmatprep.subr.mxu0 0.0
    %358 = vmatpush1.msra.mxu0 %v349
    %359 = vmatprep.subr.mxu0 0.0
    %360 = vmatpush1.msra.mxu0 %v348
    %361 = vmatprep.subr.mxu0 0.0
    %362 = vmatpush1.msra.mxu0 %v347
    %363 = vmatprep.subr.mxu0 0.0
    %364 = vmatpush1.msra.mxu0 %v346
    %365 = vmatprep.subr.mxu0 0.0
    %366 = vmatpush1.msra.mxu0 %v345
    %367 = vmatprep.subr.mxu0 0.0
    %368 = vmatpush1.msra.mxu0 %v344
    %369 = vmatprep.subr.mxu0 0.0
    %370 = vmatpush1.msra.mxu0 %v343
    %371 = vmatprep.subr.mxu0 0.0
    %372 = vmatpush1.msra.mxu0 %v342
    %373 = vmatprep.subr.mxu0 0.0
    %374 = vmatpush1.msra.mxu0 %v341
    %375 = vmatprep.subr.mxu0 0.0
    %376 = vmatpush1.msra.mxu0 %v340
    %377 = vmatprep.subr.mxu0 0.0
    %378 = vmatpush1.msra.mxu0 %v339
    %379 = vmatprep.subr.mxu0 0.0
    %380 = vmatpush1.msra.mxu0 %v338
    %381 = vmatprep.subr.mxu0 0.0
    %382 = vmatpush1.msra.mxu0 %v337
    %383 = vmatprep.subr.mxu0 0.0
    %384 = vmatpush1.msra.mxu0 %v336
    %385 = vmatprep.subr.mxu0 0.0
    %386 = vmatpush1.msra.mxu0 %v335
    %387 = vmatprep.subr.mxu0 0.0
    %388 = vmatpush1.msra.mxu0 %v334
    %389 = vmatprep.subr.mxu0 0.0
    %390 = vmatpush2.msra.mxu0 0.0
    %391 = vmatprep.subr.mxu0 0.0
    %392 = vmatpush2.msra.mxu0 0.0
    %393 = vmatprep.subr.mxu0 0.0
    %394 = vmatpush2.msra.mxu0 0.0
    %395 = vmatprep.subr.mxu0 0.0
    %396 = vmatpush2.msra.mxu0 0.0
    %397 = vmatprep.subr.mxu0 0.0
    %398 = vmatpush2.msra.mxu0 0.0
    %399 = vmatprep.subr.mxu0 0.0
    %400 = vmatpush2.msra.mxu0 0.0
    %401 = vmatprep.subr.mxu0 0.0
    %402 = vmatpush2.msra.mxu0 0.0
    %403 = vmatprep.subr.mxu0 0.0
    %404 = vmatpush2.msra.mxu0 0.0
    %405 = vmatprep.subr.mxu0 0.0
    %406 = vmatpush2.msra.mxu0 0.0
    %407 = vmatprep.subr.mxu0 0.0
    %408 = vmatpush2.msra.mxu0 0.0
    %409 = vmatprep.subr.mxu0 0.0
    %410 = vmatpush2.msra.mxu0 0.0
    %411 = vmatprep.subr.mxu0 0.0
    %412 = vmatpush2.msra.mxu0 0.0
    %413 = vmatprep.subr.mxu0 0.0
    %414 = vmatpush2.msra.mxu0 0.0
    %415 = vmatprep.subr.mxu0 0.0
    %416 = vmatpush2.msra.mxu0 0.0
    %417 = vmatprep.subr.mxu0 0.0
    %418 = vmatpush2.msra.mxu0 0.0
    %419 = vmatprep.subr.mxu0 0.0
    %420 = vmatpush2.msra.mxu0 0.0
    %421 = vmatprep.mubr.f32.mxu0 0.0
    %422 = vmatmul.mubr.f32.gmra.mxu0 %v333
    %v423 = vpop.f32.mrf.mxu0
    %v424 = vadd.f32 %v355, %v423
    %v425 = vpop.f32.mrf.mxu0
    %426 = vdwg.mxu0
    %vm427 = vcmask 39936
    %428 = vst.msk [vmem:[#allocation7] sm:$0xff] %vm427, %v424
    // Predicated region
    $region46: #{tpu_custom_call.1} parent=1 // pred_check
      _
    $region47: #{tpu_custom_call.1} parent=1 // pred_check_branch
      %430 = sbr.rel (0) target = $region49
    $region48: #{tpu_custom_call.1} parent=1 // pred_region
      %s432 = ssub.s32 128, 128
      %433 = vsyncadd [#allocation4], %s432
      %s435 = sshll.u32 [#allocation7], 4
      %s436 = int_to_ptr.vmem [resolvable:$true] %s435
      %438 = dma.vmem_to_hbm [thread:$0]  %s436, 128, %s9, [#allocation4]
    $region49: #{tpu_custom_call.1} parent=1 // pred_fallthru
      _
    // Predicated region
    $region50: #{tpu_custom_call.1} parent=1 // pred_check
      _
    $region51: #{tpu_custom_call.1} parent=1 // pred_check_branch
      %440 = sbr.rel (0) target = $region53
    $region52: #{tpu_custom_call.1} parent=1 // pred_region
      %441 = dma.done [#allocation4], 128
    $region53: #{tpu_custom_call.1} parent=1 // pred_fallthru
      _
    %442 = vsyncpa [#allocation3], 1
    %443 = vsyncpa [#allocation6], 1
    %444 = vsyncpa [#allocation4], 1

</llo_original>
